<compile_context>
chip_gen: v6e
topology: v6e:2x2x1
jax: 0.10.0
libtpu: 0.0.40
codegen_flags: <defaults>
</compile_context>

<pallas_src>
import jax
import jax.numpy as jnp
from jax.experimental import pallas as pl
from jax.experimental.pallas import tpu as pltpu


def attention_kernel(x_ref, w1_ref, b1_ref, w2_ref, b2_ref, ctx_ref, attw_ref):
    # x_ref: (TB, S, H); w1: (H, H); b1: (1, H); w2: (1, H) row; b2: (1, 1) in SMEM.
    TB, S, H = x_ref.shape
    x = x_ref[...]                                  # (TB, S, H)
    x2d = x.reshape(TB * S, H)                      # leading-dims merge: free

    # --- Linear(H, H) + tanh: one MXU matmul for the whole batch tile, EUP tanh ---
    h = jnp.tanh(
        jnp.dot(x2d, w1_ref[...], preferred_element_type=jnp.float32) + b1_ref[...]
    )                                               # (TB*S, H)

    # --- Linear(H, 1) as VPU multiply + lane reduce (avoid an N=1 MXU pass) ---
    scores = jnp.sum(h * w2_ref[...], axis=-1, keepdims=True) + b2_ref[0, 0]  # (TB*S, 1)
    scores = scores.reshape(TB, S, 1)               # leading-dims split: free

    # --- softmax over the sequence (sublane) axis; exact normalization ---
    m = jnp.max(scores, axis=1, keepdims=True)      # (TB, 1, 1)  XLU reduce
    e = jnp.exp(scores - m)                         # (TB, S, 1)  EUP
    w = e / jnp.sum(e, axis=1, keepdims=True)       # (TB, S, 1)  exact divide

    # --- context vector: broadcast-multiply + sublane-axis sum (VPU + XLU) ---
    ctx = jnp.sum(w * x.astype(jnp.float32), axis=1)        # (TB, H)

    ctx_ref[...] = ctx.astype(ctx_ref.dtype)                 # (TB, H), lane-dense
    attw_ref[...] = jnp.squeeze(w, axis=-1).astype(attw_ref.dtype)  # (TB, S)


def _pick_batch_tile(B, S, H, itemsize, target_rows=512,
                     vmem_budget_bytes=24 * 1024 * 1024):
    """Pick TB (batch elements per grid step) so Linear1 sees ~target_rows MXU rows
    while the per-step working set fits the VMEM budget. TB always divides B.
    (For v7x's 64 MiB VMEM, pass roughly half the default budget.)"""
    tb = max(1, min(B, target_rows // max(S, 1)))

    def step_bytes(t):
        x_tile = t * S * H * itemsize          # input tile (double-buffered below)
        interm = 2 * t * S * H * 4             # h + (w*x) f32 intermediates
        weights = (H * H + 2 * H) * 4
        outs = t * (H + S) * 4
        return 2 * x_tile + interm + 2 * weights + 2 * outs

    while tb > 1 and step_bytes(tb) > vmem_budget_bytes:
        tb //= 2
    while B % tb != 0:                         # keep the grid exact (no remainder tile)
        tb -= 1
    return tb, step_bytes(tb)


@jax.jit
def attention_layer(x, w1, b1, w2, b2):
    """x: (B, S, H) float32. Returns (context (B, H), attention_weights (B, S, 1))."""
    B, S, H = x.shape
    TB, est_bytes = _pick_batch_tile(B, S, H, jnp.dtype(x.dtype).itemsize)
    grid = (B // TB,)

    w2_row = w2.reshape(1, H)      # (H, 1) -> (1, H): wrapper-side, free
    b1_2d = b1.reshape(1, H)
    b2_2d = b2.reshape(1, 1)

    # Raise the scoped-VMEM limit to the computed tile budget (with headroom),
    # capped at v7x's 64 MiB physical VMEM.
    vmem_limit = int(min(64 * 1024 * 1024, max(16 * 1024 * 1024, est_bytes * 3 // 2)))

    ctx, attw = pl.pallas_call(
        attention_kernel,
        grid=grid,
        out_shape=(
            jax.ShapeDtypeStruct((B, H), x.dtype),
            jax.ShapeDtypeStruct((B, S), x.dtype),
        ),
        in_specs=[
            pl.BlockSpec((TB, S, H), lambda b: (b, 0, 0)),          # x (batched tile)
            pl.BlockSpec((H, H), lambda b: (0, 0)),                 # w1
            pl.BlockSpec((1, H), lambda b: (0, 0)),                 # b1
            pl.BlockSpec((1, H), lambda b: (0, 0)),                 # w2 (row)
            pl.BlockSpec(memory_space=pltpu.MemorySpace.SMEM),      # b2 scalar
        ],
        out_specs=(
            pl.BlockSpec((TB, H), lambda b: (b, 0)),                # context
            pl.BlockSpec((TB, S), lambda b: (b, 0)),                # attention weights
        ),
        compiler_params=pltpu.CompilerParams(
            dimension_semantics=("parallel",),
            vmem_limit_bytes=vmem_limit,
        ),
    )(x, w1, b1_2d, w2_row, b2_2d)

    context = ctx
    attention_weights = attw.reshape(B, S, 1)   # match torch's (B, S, 1) output: free
    return context, attention_weights


def reference(x, w1, b1, w2, b2):
    scores = jnp.tanh(x @ w1 + b1) @ w2 + b2     # (B, S, 1)
    w = jax.nn.softmax(scores, axis=1)           # softmax over seq (torch dim=1)
    ctx = jnp.sum(w * x, axis=1)
    return ctx, w


if __name__ == "__main__":
    B, S, H = 2, 8, 32
    key = jax.random.PRNGKey(0)
    kx, k1, k2, k3, k4 = jax.random.split(key, 5)

    # Deterministic parameter init (PyTorch-Linear-style uniform bound 1/sqrt(H)).
    bound = 1.0 / jnp.sqrt(jnp.float32(H))
    x  = jax.random.normal(kx, (B, S, H), dtype=jnp.float32)
    w1 = jax.random.uniform(k1, (H, H), minval=-bound, maxval=bound, dtype=jnp.float32)
    b1 = jax.random.uniform(k2, (1, H), minval=-bound, maxval=bound, dtype=jnp.float32)
    w2 = jax.random.uniform(k3, (H, 1), minval=-bound, maxval=bound, dtype=jnp.float32)
    b2 = jax.random.uniform(k4, (1, 1), minval=-bound, maxval=bound, dtype=jnp.float32)

    ctx, attw = attention_layer(x, w1, b1, w2, b2)
    jax.block_until_ready((ctx, attw))

    ctx_ref, attw_ref = reference(x, w1, b1, w2, b2)
    assert ctx.shape == (B, H) and attw.shape == (B, S, 1)
    assert jnp.allclose(ctx, ctx_ref, atol=1e-4, rtol=1e-4)
    assert jnp.allclose(attw, attw_ref, atol=1e-4, rtol=1e-4)

    print("KERNEL_OK")
</pallas_src>

<mosaic_0001>
module attributes {stable_mosaic.version = 11 : i64} {
  func.func @attention_kernel(%arg0: i32, %arg1: memref<2x8x32xf32, #tpu.memory_space<vmem>>, %arg2: memref<32x32xf32, #tpu.memory_space<vmem>>, %arg3: memref<1x32xf32, #tpu.memory_space<vmem>>, %arg4: memref<1x32xf32, #tpu.memory_space<vmem>>, %arg5: memref<1x1xf32, #tpu.memory_space<smem>>, %arg6: memref<2x32xf32, #tpu.memory_space<vmem>>, %arg7: memref<2x8xf32, #tpu.memory_space<vmem>>) attributes {dimension_semantics = [#tpu.dimension_semantics<parallel>], iteration_bounds = array<i64: 1>, scalar_prefetch = 0 : i64, scratch_operands = 0 : i64, tpu.core_type = #tpu.core_type<tc>, window_params = [{transform_indices = @transform_0, window_bounds = array<i64: 2, 8, 32>}, {pipeline_mode = #tpu.pipeline_mode<synchronous>, transform_indices = @transform_1, window_bounds = array<i64: 32, 32>}, {pipeline_mode = #tpu.pipeline_mode<synchronous>, transform_indices = @transform_2, window_bounds = array<i64: 1, 32>}, {pipeline_mode = #tpu.pipeline_mode<synchronous>, transform_indices = @transform_3, window_bounds = array<i64: 1, 32>}, {transform_indices = @transform_4, window_bounds = array<i64: 1, 1>}, {transform_indices = @transform_5, window_bounds = array<i64: 2, 32>}, {transform_indices = @transform_6, window_bounds = array<i64: 2, 8>}]} {
    %c0 = arith.constant 0 : index
    %c0_0 = arith.constant 0 : index
    %c0_1 = arith.constant 0 : index
    %0 = vector.load %arg1[%c0, %c0_0, %c0_1] : memref<2x8x32xf32, #tpu.memory_space<vmem>>, vector<2x8x32xf32>
    %1 = vector.shape_cast %0 : vector<2x8x32xf32> to vector<16x32xf32>
    %c0_2 = arith.constant 0 : index
    %c0_3 = arith.constant 0 : index
    %2 = vector.load %arg2[%c0_2, %c0_3] : memref<32x32xf32, #tpu.memory_space<vmem>>, vector<32x32xf32>
    %cst = arith.constant dense<0.000000e+00> : vector<16x32xf32>
    %3 = tpu.matmul %1, %2, %cst {dimension_numbers = #tpu.dot_dimension_numbers<[1], [0], [0], [1], [0, 0, 1, 1], [], []>} : vector<16x32xf32>, vector<32x32xf32>, vector<16x32xf32> -> vector<16x32xf32>
    %c0_4 = arith.constant 0 : index
    %c0_5 = arith.constant 0 : index
    %4 = vector.load %arg3[%c0_4, %c0_5] : memref<1x32xf32, #tpu.memory_space<vmem>>, vector<1x32xf32>
    %5 = vector.broadcast %4 : vector<1x32xf32> to vector<16x32xf32>
    %6 = arith.addf %3, %5 : vector<16x32xf32>
    %7 = math.tanh %6 : vector<16x32xf32>
    %c0_6 = arith.constant 0 : index
    %c0_7 = arith.constant 0 : index
    %8 = vector.load %arg4[%c0_6, %c0_7] : memref<1x32xf32, #tpu.memory_space<vmem>>, vector<1x32xf32>
    %9 = vector.broadcast %8 : vector<1x32xf32> to vector<16x32xf32>
    %10 = arith.mulf %7, %9 : vector<16x32xf32>
    %cst_8 = arith.constant dense<0.000000e+00> : vector<16xf32>
    %11 = vector.multi_reduction <add>, %10, %cst_8 [1] : vector<16x32xf32> to vector<16xf32>
    %12 = vector.shape_cast %11 : vector<16xf32> to vector<16x1xf32>
    %c0_9 = arith.constant 0 : index
    %c0_10 = arith.constant 0 : index
    %13 = memref.load %arg5[%c0_9, %c0_10] : memref<1x1xf32, #tpu.memory_space<smem>>
    %14 = vector.broadcast %13 : f32 to vector<16x1xf32>
    %15 = arith.addf %12, %14 : vector<16x1xf32>
    %16 = vector.shape_cast %15 : vector<16x1xf32> to vector<2x8x1xf32>
    %cst_11 = arith.constant dense<0xFF800000> : vector<2x1xf32>
    %17 = vector.multi_reduction <maximumf>, %16, %cst_11 [1] : vector<2x8x1xf32> to vector<2x1xf32>
    %18 = vector.shape_cast %17 : vector<2x1xf32> to vector<2x1x1xf32>
    %19 = vector.broadcast %18 : vector<2x1x1xf32> to vector<2x8x1xf32>
    %20 = arith.subf %16, %19 : vector<2x8x1xf32>
    %21 = math.exp %20 : vector<2x8x1xf32>
    %cst_12 = arith.constant dense<0.000000e+00> : vector<2x1xf32>
    %22 = vector.multi_reduction <add>, %21, %cst_12 [1] : vector<2x8x1xf32> to vector<2x1xf32>
    %23 = vector.shape_cast %22 : vector<2x1xf32> to vector<2x1x1xf32>
    %24 = vector.broadcast %23 : vector<2x1x1xf32> to vector<2x8x1xf32>
    %25 = arith.divf %21, %24 : vector<2x8x1xf32>
    %26 = vector.broadcast %25 : vector<2x8x1xf32> to vector<2x8x32xf32>
    %27 = arith.mulf %26, %0 : vector<2x8x32xf32>
    %cst_13 = arith.constant dense<0.000000e+00> : vector<2x32xf32>
    %28 = vector.multi_reduction <add>, %27, %cst_13 [1] : vector<2x8x32xf32> to vector<2x32xf32>
    %c0_14 = arith.constant 0 : index
    %c0_15 = arith.constant 0 : index
    %29 = vector.load %arg6[%c0_14, %c0_15] : memref<2x32xf32, #tpu.memory_space<vmem>>, vector<2x32xf32>
    tpu.vector_store %arg6[%c0_14, %c0_15], %28 {strides = array<i32>} : memref<2x32xf32, #tpu.memory_space<vmem>>, vector<2x32xf32>,
    %30 = vector.shape_cast %25 : vector<2x8x1xf32> to vector<2x8xf32>
    %c0_16 = arith.constant 0 : index
    %c0_17 = arith.constant 0 : index
    %31 = vector.load %arg7[%c0_16, %c0_17] : memref<2x8xf32, #tpu.memory_space<vmem>>, vector<2x8xf32>
    tpu.vector_store %arg7[%c0_16, %c0_17], %30 {strides = array<i32>} : memref<2x8xf32, #tpu.memory_space<vmem>>, vector<2x8xf32>,
    return
  }
  func.func @transform_0(%arg0: i32) -> (i32, i32, i32) {
    %c0_i32 = arith.constant 0 : i32
    %c0_i32_0 = arith.constant 0 : i32
    %c0_i32_1 = arith.constant 0 : i32
    return %arg0, %c0_i32, %c0_i32_0 : i32, i32, i32
  }
  func.func @transform_1(%arg0: i32) -> (i32, i32) {
    %c0_i32 = arith.constant 0 : i32
    %c0_i32_0 = arith.constant 0 : i32
    %c0_i32_1 = arith.constant 0 : i32
    return %c0_i32, %c0_i32_0 : i32, i32
  }
  func.func @transform_2(%arg0: i32) -> (i32, i32) {
    %c0_i32 = arith.constant 0 : i32
    %c0_i32_0 = arith.constant 0 : i32
    %c0_i32_1 = arith.constant 0 : i32
    return %c0_i32, %c0_i32_0 : i32, i32
  }
  func.func @transform_3(%arg0: i32) -> (i32, i32) {
    %c0_i32 = arith.constant 0 : i32
    %c0_i32_0 = arith.constant 0 : i32
    %c0_i32_1 = arith.constant 0 : i32
    return %c0_i32, %c0_i32_0 : i32, i32
  }
  func.func @transform_4(%arg0: i32) -> (i32, i32) {
    %c0_i32 = arith.constant 0 : i32
    %c0_i32_0 = arith.constant 0 : i32
    %c0_i32_1 = arith.constant 0 : i32
    return %c0_i32, %c0_i32_0 : i32, i32
  }
  func.func @transform_5(%arg0: i32) -> (i32, i32) {
    %c0_i32 = arith.constant 0 : i32
    %c0_i32_0 = arith.constant 0 : i32
    return %arg0, %c0_i32 : i32, i32
  }
  func.func @transform_6(%arg0: i32) -> (i32, i32) {
    %c0_i32 = arith.constant 0 : i32
    %c0_i32_0 = arith.constant 0 : i32
    return %arg0, %c0_i32 : i32, i32
  }
}

</mosaic_0001>

<llo_original>
// kernel: attention_layer.1
$region0: #{attention_layer.1}
  #allocation0 [shape = 'u32[]', space=smem, size = 0x4, offset = 0x4, fixed_abs, tag = 'smem constant byte address 0x4 - core index']
  #allocation1 [shape = 'u32[144,128]{1,0:T(1,128)}', space=vmem, size = 0x12000, scoped, tag = 'internal scratch']
  #allocation2 [shape = 'f32[1,1]{1,0:T(1,128)S(6)}', space=smem, size = 0x200, scoped, tag = 'scoped memory for attention_layer.1']
  %s0 = inlined_call_operand.hbm [shape: f32[2,8,32], index: 0, kind: input, shape index: {}]
  %s1 = inlined_call_operand.hbm [shape: f32[32,32], index: 1, kind: input, shape index: {}]
  %s2 = inlined_call_operand.vmem [shape: f32[1,32], index: 2, kind: input, shape index: {}]
  %s3 = inlined_call_operand.vmem [shape: f32[1,32], index: 3, kind: input, shape index: {}]
  %s4 = inlined_call_operand.<no memory space> [shape: f32[1,1], index: 4, kind: input, shape index: {}]
  %s5 = inlined_call_operand.hbm [shape: f32[2,32], index: 5, kind: output, shape index: {0}]
  %s6 = inlined_call_operand.hbm [shape: f32[2,8], index: 6, kind: output, shape index: {1}]
  %7 = xla_tuple %s5, %s6
  %s8 = sld [smem:[#allocation0]]
  $region46: #{attention_layer.1} parent=0
    _
  %s10 = ssub.s32 1, %s8
  %s11 = scalar_select 0, %s10, %s8
  %12 = sst [smem:[#allocation2]] %s4
  $region1: #{attention_layer.1} parent=0
    #allocation3 [shape = 'u8[8192]{0}', space=vmem, size = 0x2000, scoped, tag = 'input window, operand 0, single buffered']
    #allocation4 [shape = 's32[1]{0}', space=sflag, size = 0x4, scoped, tag = 'scoped memory for attention_layer.1']
    #allocation5 [shape = 's32[1]{0}', space=sflag, size = 0x4, scoped, tag = 'scoped memory for attention_layer.1']
    #allocation6 [shape = 'u8[16384]{0}', space=vmem, size = 0x4000, scoped, tag = 'input window, operand 1, single buffered']
    #allocation7 [shape = 's32[1]{0}', space=sflag, size = 0x4, scoped, tag = 'scoped memory for attention_layer.1']
    #allocation8 [shape = 'u8[1024]{0}', space=vmem, size = 0x400, scoped, tag = 'output window, operand 0, single buffered']
    #allocation9 [shape = 'u8[1024]{0}', space=vmem, size = 0x400, scoped, tag = 'output window, operand 1, single buffered']
    #allocation10 [shape = 's32[1]{0}', space=sflag, size = 0x4, scoped, tag = 'scoped memory for attention_layer.1']
    %13 = vsyncpa [#allocation4], 0
    %14 = vsyncpa [#allocation7], 0
    %15 = vsyncpa [#allocation5], 0
    %16 = vsyncpa [#allocation10], 0
    // Predicated region
    $region2: #{attention_layer.1} parent=1 // pred_check
      _
    $region3: #{attention_layer.1} parent=1 // pred_check_branch
      %18 = sbr.rel (0) target = $region5
    $region4: #{attention_layer.1} parent=1 // pred_region
      %s20 = ssub.s32 256, 256
      %21 = vsyncadd [#allocation4], %s20
      %s22 = sshll.u32 [#allocation3], 4
      %s23 = int_to_ptr.vmem [resolvable:$true] %s22
      %28 = dma.hbm_to_vmem [thread:$0]  %s0, 256, %s23, [#allocation4], 128, 128, 8
    $region5: #{attention_layer.1} parent=1 // pred_fallthru
      _
    // Predicated region
    $region6: #{attention_layer.1} parent=1 // pred_check
      _
    $region7: #{attention_layer.1} parent=1 // pred_check_branch
      %30 = sbr.rel (0) target = $region9
    $region8: #{attention_layer.1} parent=1 // pred_region
      %s32 = ssub.s32 512, 512
      %33 = vsyncadd [#allocation7], %s32
      %s34 = sshll.u32 [#allocation6], 4
      %s35 = int_to_ptr.vmem [resolvable:$true] %s34
      %40 = dma.hbm_to_vmem [thread:$0]  %s1, 512, %s35, [#allocation7], 128, 128, 8
    $region9: #{attention_layer.1} parent=1 // pred_fallthru
      _
    // Predicated region
    $region10: #{attention_layer.1} parent=1 // pred_check
      _
    $region11: #{attention_layer.1} parent=1 // pred_check_branch
      %42 = sbr.rel (0) target = $region13
    $region12: #{attention_layer.1} parent=1 // pred_region
      _
    $region13: #{attention_layer.1} parent=1 // pred_fallthru
      _
    // Predicated region
    $region14: #{attention_layer.1} parent=1 // pred_check
      _
    $region15: #{attention_layer.1} parent=1 // pred_check_branch
      %44 = sbr.rel (0) target = $region17
    $region16: #{attention_layer.1} parent=1 // pred_region
      _
    $region17: #{attention_layer.1} parent=1 // pred_fallthru
      _
    // Predicated region
    $region18: #{attention_layer.1} parent=1 // pred_check
      _
    $region19: #{attention_layer.1} parent=1 // pred_check_branch
      %46 = sbr.rel (0) target = $region21
    $region20: #{attention_layer.1} parent=1 // pred_region
      _
    $region21: #{attention_layer.1} parent=1 // pred_fallthru
      _
    // Predicated region
    $region22: #{attention_layer.1} parent=1 // pred_check
      _
    $region23: #{attention_layer.1} parent=1 // pred_check_branch
      %48 = sbr.rel (0) target = $region25
    $region24: #{attention_layer.1} parent=1 // pred_region
      %49 = dma.done [#allocation4], 256
    $region25: #{attention_layer.1} parent=1 // pred_fallthru
      _
    // Predicated region
    $region26: #{attention_layer.1} parent=1 // pred_check
      _
    $region27: #{attention_layer.1} parent=1 // pred_check_branch
      %51 = sbr.rel (0) target = $region29
    $region28: #{attention_layer.1} parent=1 // pred_region
      %52 = dma.done [#allocation7], 512
    $region29: #{attention_layer.1} parent=1 // pred_fallthru
      _
    %v53 = vld [vmem:[#allocation3] sm:$0xff]
    %v54 = vld [vmem:[#allocation3 + $0x8] sm:$0xff]
    %v55 = vld [vmem:[#allocation6] sm:$0xff]
    %v56 = vld [vmem:[#allocation6 + $0x8] sm:$0xff]
    %v57 = vld [vmem:[#allocation6 + $0x10] sm:$0xff]
    %v58 = vld [vmem:[#allocation6 + $0x18] sm:$0xff]
    %v59 = vld [vmem:[%s2] sm:$0x1]
    %v61 = vlaneseq
    %v62 = vshrl.u32 %v61, 7
    %v63 = vsub.s32 0, %v62
    %v64 = vrot.slane %v59, %v63
    %vm66 = vcmask 261120
    %v68 = vsel %vm66, %v53, 0
    %v71 = vsel %vm66, %v54, 0
    %73 = vmatprep.subr.mxu0 0.0
    %74 = vmatpush1.msra.mxu0 0.0
    %75 = vmatprep.subr.mxu0 0.0
    %76 = vmatpush1.msra.mxu0 0.0
    %77 = vmatprep.subr.mxu0 0.0
    %78 = vmatpush1.msra.mxu0 0.0
    %79 = vmatprep.subr.mxu0 0.0
    %80 = vmatpush1.msra.mxu0 0.0
    %81 = vmatprep.subr.mxu0 0.0
    %82 = vmatpush1.msra.mxu0 0.0
    %83 = vmatprep.subr.mxu0 0.0
    %84 = vmatpush1.msra.mxu0 0.0
    %85 = vmatprep.subr.mxu0 0.0
    %86 = vmatpush1.msra.mxu0 0.0
    %87 = vmatprep.subr.mxu0 0.0
    %88 = vmatpush1.msra.mxu0 0.0
    %89 = vmatprep.subr.mxu0 0.0
    %90 = vmatpush1.msra.mxu0 0.0
    %91 = vmatprep.subr.mxu0 0.0
    %92 = vmatpush1.msra.mxu0 0.0
    %93 = vmatprep.subr.mxu0 0.0
    %94 = vmatpush1.msra.mxu0 0.0
    %95 = vmatprep.subr.mxu0 0.0
    %96 = vmatpush1.msra.mxu0 0.0
    %97 = vmatprep.subr.mxu0 0.0
    %98 = vmatpush1.msra.mxu0 %v58
    %99 = vmatprep.subr.mxu0 0.0
    %100 = vmatpush1.msra.mxu0 %v57
    %101 = vmatprep.subr.mxu0 0.0
    %102 = vmatpush1.msra.mxu0 %v56
    %103 = vmatprep.subr.mxu0 0.0
    %104 = vmatpush1.msra.mxu0 %v55
    %105 = vmatprep.subr.mxu0 0.0
    %106 = vmatpush2.msra.mxu0 0.0
    %107 = vmatprep.subr.mxu0 0.0
    %108 = vmatpush2.msra.mxu0 0.0
    %109 = vmatprep.subr.mxu0 0.0
    %110 = vmatpush2.msra.mxu0 0.0
    %111 = vmatprep.subr.mxu0 0.0
    %112 = vmatpush2.msra.mxu0 0.0
    %113 = vmatprep.subr.mxu0 0.0
    %114 = vmatpush2.msra.mxu0 0.0
    %115 = vmatprep.subr.mxu0 0.0
    %116 = vmatpush2.msra.mxu0 0.0
    %117 = vmatprep.subr.mxu0 0.0
    %118 = vmatpush2.msra.mxu0 0.0
    %119 = vmatprep.subr.mxu0 0.0
    %120 = vmatpush2.msra.mxu0 0.0
    %121 = vmatprep.subr.mxu0 0.0
    %122 = vmatpush2.msra.mxu0 0.0
    %123 = vmatprep.subr.mxu0 0.0
    %124 = vmatpush2.msra.mxu0 0.0
    %125 = vmatprep.subr.mxu0 0.0
    %126 = vmatpush2.msra.mxu0 0.0
    %127 = vmatprep.subr.mxu0 0.0
    %128 = vmatpush2.msra.mxu0 0.0
    %129 = vmatprep.subr.mxu0 0.0
    %130 = vmatpush2.msra.mxu0 0.0
    %131 = vmatprep.subr.mxu0 0.0
    %132 = vmatpush2.msra.mxu0 0.0
    %133 = vmatprep.subr.mxu0 0.0
    %134 = vmatpush2.msra.mxu0 0.0
    %135 = vmatprep.subr.mxu0 0.0
    %136 = vmatpush2.msra.mxu0 0.0
    %137 = vmatprep.mubr.f32.mxu0 0.0
    %138 = vmatmul.mubr.f32.gmra.mxu0 %v68
    %v139 = vpop.f32.mrf.mxu0
    %v140 = vadd.f32 %v64, %v139
    %v141 = vpop.f32.mrf.mxu0
    %142 = vmatprep.mubr.f32.mxu0 0.0
    %143 = vmatmul.mubr.f32.gmra.mxu0 %v71
    %v144 = vpop.f32.mrf.mxu0
    %v145 = vadd.f32 %v64, %v144
    %v146 = vpop.f32.mrf.mxu0
    %147 = vdwg.mxu0
    %v148 = vtanh.pop %v140
    %v149 = vtanh.pop %v145
    %v150 = vld [vmem:[%s3] sm:$0x1]
    %v152 = vlaneseq
    %v153 = vshrl.u32 %v152, 7
    %v154 = vsub.s32 0, %v153
    %v155 = vrot.slane %v150, %v154
    %v157 = vmul.f32 %v148, %v155
    %v158 = vmul.f32 %v149, %v155
    %v159 = vsel %vm66, %v157, 0.0
    %160 = vadd.xlane.f32.xlu0 %v159
    %v161 = vpop.xlane.xlu0 %160
    %v162 = vsel %vm66, %v158, 0.0
    %163 = vadd.xlane.f32.xlu0 %v162
    %v164 = vpop.xlane.xlu0 %163
    %s165 = sld [smem:[#allocation2]]
    %v166 = vstv %s165
    %v167 = vadd.f32 %v161, %v166
    %v168 = vadd.f32 %v164, %v166
    %v169 = vrot.slane %v167, 4
    %v170 = vmax.f32 %v167, %v169
    %v171 = vrot.slane %v170, 2
    %v172 = vmax.f32 %v170, %v171
    %v173 = vrot.slane %v172, 1
    %v174 = vmax.f32 %v172, %v173
    %v175 = vrot.slane %v168, 4
    %v176 = vmax.f32 %v168, %v175
    %v177 = vrot.slane %v176, 2
    %v178 = vmax.f32 %v176, %v177
    %v179 = vrot.slane %v178, 1
    %v180 = vmax.f32 %v178, %v179
    %v181 = vsub.f32 %v167, %v174
    %v182 = vsub.f32 %v168, %v180
    %v183 = vmul.f32 %v181, 1.442695
    %v184 = vpow.pop %v183
    %v185 = vmul.f32 %v182, 1.442695
    %v186 = vpow.pop %v185
    %v187 = vrot.slane %v184, 4
    %v188 = vadd.f32 %v184, %v187
    %v189 = vrot.slane %v188, 2
    %v190 = vadd.f32 %v188, %v189
    %v191 = vrot.slane %v190, 1
    %v192 = vadd.f32 %v190, %v191
    %v193 = vrot.slane %v186, 4
    %v194 = vadd.f32 %v186, %v193
    %v195 = vrot.slane %v194, 2
    %v196 = vadd.f32 %v194, %v195
    %v197 = vrot.slane %v196, 1
    %v198 = vadd.f32 %v196, %v197
    %v199 = vrcp.pop %v192
    %v200 = vmul.f32 %v184, %v199
    %v201 = vrcp.pop %v198
    %v202 = vmul.f32 %v186, %v201
    %v203 = vmul.f32 %v200, %v53
    %v204 = vmul.f32 %v202, %v54
    %v205 = vsel %vm66, %v203, 0.0
    %v206 = vrot.slane %v205, 4
    %v207 = vadd.f32 %v205, %v206
    %v208 = vrot.slane %v207, 2
    %v209 = vadd.f32 %v207, %v208
    %v210 = vrot.slane %v209, 1
    %v211 = vadd.f32 %v209, %v210
    %v212 = vsel %vm66, %v204, 0.0
    %v213 = vrot.slane %v212, 4
    %v214 = vadd.f32 %v212, %v213
    %v215 = vrot.slane %v214, 2
    %v216 = vadd.f32 %v214, %v215
    %v217 = vrot.slane %v216, 1
    %v218 = vadd.f32 %v216, %v217
    %vm221 = vcmask 1041409
    %v222 = vsel %vm221, %v218, %v211
    %vm224 = vcmask 254976
    %225 = vst.msk [vmem:[#allocation8] sm:$0x3] %vm224, %v222
    %v228 = vlaneseq
    %v229 = vand.u32 %v228, 127
    %v230 = vlaneseq
    %v231 = vshrl.u32 %v230, 7
    %v232 = vsub.s32 %v229, %v231
    %v233 = vrot.slane %v200, %v232
    %v234 = vlaneseq
    %v235 = vshrl.u32 %v234, 7
    %v236 = vsub.s32 %v229, %v235
    %v237 = vrot.slane %v202, %v236
    %v238 = vsel %vm221, %v237, %v233
    %vm240 = vcmask 58368
    %241 = vst.msk [vmem:[#allocation9] sm:$0x3] %vm240, %v238
    // Predicated region
    $region30: #{attention_layer.1} parent=1 // pred_check
      _
    $region31: #{attention_layer.1} parent=1 // pred_check_branch
      %243 = sbr.rel (0) target = $region33
    $region32: #{attention_layer.1} parent=1 // pred_region
      %s245 = ssub.s32 32, 32
      %246 = vsyncadd [#allocation5], %s245
      %s248 = sshll.u32 [#allocation8], 4
      %s249 = int_to_ptr.vmem [resolvable:$true] %s248
      %251 = dma.vmem_to_hbm [thread:$0]  %s249, 32, %s5, [#allocation5]
    $region33: #{attention_layer.1} parent=1 // pred_fallthru
      _
    // Predicated region
    $region34: #{attention_layer.1} parent=1 // pred_check
      _
    $region35: #{attention_layer.1} parent=1 // pred_check_branch
      %253 = sbr.rel (0) target = $region37
    $region36: #{attention_layer.1} parent=1 // pred_region
      %s255 = ssub.s32 32, 32
      %256 = vsyncadd [#allocation10], %s255
      %s258 = sshll.u32 [#allocation9], 4
      %s259 = int_to_ptr.vmem [resolvable:$true] %s258
      %261 = dma.vmem_to_hbm [thread:$0]  %s259, 32, %s6, [#allocation10]
    $region37: #{attention_layer.1} parent=1 // pred_fallthru
      _
    // Predicated region
    $region38: #{attention_layer.1} parent=1 // pred_check
      _
    $region39: #{attention_layer.1} parent=1 // pred_check_branch
      %263 = sbr.rel (0) target = $region41
    $region40: #{attention_layer.1} parent=1 // pred_region
      %264 = dma.done [#allocation5], 32
    $region41: #{attention_layer.1} parent=1 // pred_fallthru
      _
    // Predicated region
    $region42: #{attention_layer.1} parent=1 // pred_check
      _
    $region43: #{attention_layer.1} parent=1 // pred_check_branch
      %266 = sbr.rel (0) target = $region45
    $region44: #{attention_layer.1} parent=1 // pred_region
      %267 = dma.done [#allocation10], 32
    $region45: #{attention_layer.1} parent=1 // pred_fallthru
      _
    %268 = vsyncpa [#allocation4], 1
    %269 = vsyncpa [#allocation7], 1
    %270 = vsyncpa [#allocation5], 1
    %271 = vsyncpa [#allocation10], 1

</llo_original>
